<compile_context>
chip_gen: v7x
topology: tpu7x:2x2x1
jax: 0.10.0
libtpu: 0.0.40
codegen_flags: <defaults>
</compile_context>

<pallas_src>
import jax
import jax.numpy as jnp
from jax.experimental import pallas as pl
from jax.experimental.pallas import tpu as pltpu


def critic_kernel(x_ref,
                  w1_ref, b1_ref,
                  w2_ref, b2_ref,
                  w3_ref, b3_ref,
                  w4_ref, b4_ref,
                  o_ref):
    """One batch-tile of the Critic MLP, fully fused in VMEM.

    Activations are kept transposed as (H, tile): batch on the 128-lane axis.
    """
    def leaky_relu(h):
        # vmul + vmax (2 VALU ops/elem) instead of vmul + vcmp + vsel.
        return jnp.maximum(h, 0.2 * h)

    x = x_ref[...].astype(jnp.bfloat16)                      # (tile, in)

    # h1T = W1 @ x^T  -> (H, tile): contract the shared `in` axis directly so
    # no explicit f32 transpose of x is materialized.
    h = jnp.einsum("hk,nk->hn", w1_ref[...], x,
                   preferred_element_type=jnp.float32)
    h = leaky_relu(h + b1_ref[...])

    h = jnp.dot(w2_ref[...], h.astype(jnp.bfloat16),
                preferred_element_type=jnp.float32)
    h = leaky_relu(h + b2_ref[...])

    h = jnp.dot(w3_ref[...], h.astype(jnp.bfloat16),
                preferred_element_type=jnp.float32)
    h = leaky_relu(h + b3_ref[...])

    # Final Linear(H, 1): broadcast-multiply by w4 (H, 1) + sublane reduce
    # (XLU) -> lane-dense (1, tile) output row (no N=1 MXU pass, no masked
    # single-lane stores).
    out = jnp.sum(h * w4_ref[...], axis=0, keepdims=True) + b4_ref[...]
    o_ref[...] = out.astype(o_ref.dtype)


def critic_forward(x, params, *, batch_tile=8192):
    """x: (B, input_dim) float32.  params: PyTorch-native w{i} (out,in), b{i} (out,)."""
    B, input_dim = x.shape
    hidden_dim = params["w1"].shape[0]

    # ---- batch tile selection -------------------------------------------
    tile = max(128, (int(batch_tile) // 128) * 128)
    # Keep >=2 grid steps on large batches so both v7x TensorCores get work.
    half = ((pl.cdiv(B, 2) + 127) // 128) * 128
    tile = min(tile, max(128, half))

    # Clamp the tile to a conservative VMEM budget (v7x: 64 MiB physical).
    def per_step_vmem(t):
        return (2 * t * 128 * 4              # x block (lanes padded 16->128), double-buffered
                + 2 * 8 * t * 4              # (1, tile) output block, double-buffered
                + 8 * hidden_dim * t * 4     # live (H, tile) intermediates (headroom)
                + (1 << 20))                 # params + misc slack
    VMEM_BUDGET = 40 * 1024 * 1024
    while tile > 128 and per_step_vmem(tile) > VMEM_BUDGET:
        tile = max(128, ((tile // 2) // 128) * 128)

    num_tiles = pl.cdiv(B, tile)
    B_pad = num_tiles * tile
    x_p = x if B_pad == B else jnp.pad(x, ((0, B_pad - B), (0, 0)))

    # One-time dtype / layout prep of the (tiny) parameters.
    w1 = params["w1"].astype(jnp.bfloat16)                          # (H, in)
    w2 = params["w2"].astype(jnp.bfloat16)                          # (H, H)
    w3 = params["w3"].astype(jnp.bfloat16)                          # (H, H)
    b1 = params["b1"].reshape(hidden_dim, 1).astype(jnp.float32)    # (H, 1)
    b2 = params["b2"].reshape(hidden_dim, 1).astype(jnp.float32)
    b3 = params["b3"].reshape(hidden_dim, 1).astype(jnp.float32)
    w4 = params["w4"].reshape(hidden_dim, 1).astype(jnp.float32)    # (H, 1) for VPU/XLU
    b4 = params["b4"].reshape(1, 1).astype(jnp.float32)

    def full_spec(shape):
        return pl.BlockSpec(shape, lambda i: (0, 0))

    flops = 2 * B_pad * (input_dim * hidden_dim
                         + 2 * hidden_dim * hidden_dim
                         + hidden_dim)
    bytes_accessed = (x_p.size * 4
                      + (w1.size + w2.size + w3.size) * 2
                      + (b1.size + b2.size + b3.size + w4.size + b4.size) * 4
                      + B_pad * 4)
    cost = pl.CostEstimate(flops=flops, transcendentals=0,
                           bytes_accessed=bytes_accessed)

    vmem_limit = int(min(48 * 1024 * 1024,
                         max(32 * 1024 * 1024, per_step_vmem(tile))))

    out_row = pl.pallas_call(
        critic_kernel,
        out_shape=jax.ShapeDtypeStruct((1, B_pad), jnp.float32),
        grid_spec=pltpu.PrefetchScalarGridSpec(
            num_scalar_prefetch=0,
            grid=(num_tiles,),
            in_specs=[
                pl.BlockSpec((tile, input_dim), lambda i: (i, 0)),   # x tile
                full_spec(w1.shape), full_spec(b1.shape),
                full_spec(w2.shape), full_spec(b2.shape),
                full_spec(w3.shape), full_spec(b3.shape),
                full_spec(w4.shape), full_spec(b4.shape),
            ],
            out_specs=pl.BlockSpec((1, tile), lambda i: (0, i)),     # lane-dense row
        ),
        compiler_params=pltpu.CompilerParams(
            dimension_semantics=("parallel",),
            vmem_limit_bytes=vmem_limit,
        ),
        cost_estimate=cost,
    )(x_p, w1, b1, w2, b2, w3, b3, w4, b4)

    return out_row[0, :B].reshape(B, 1)


def init_critic_params(key, input_dim, hidden_dim):
    """nn.Linear default init (uniform +/- 1/sqrt(fan_in)).
    PyTorch-native shapes: weights (out, in), biases (out,)."""
    dims = [(hidden_dim, input_dim),
            (hidden_dim, hidden_dim),
            (hidden_dim, hidden_dim),
            (1, hidden_dim)]
    params = {}
    for idx, (fan_out, fan_in) in enumerate(dims, start=1):
        key, kw, kb = jax.random.split(key, 3)
        bound = 1.0 / (float(fan_in) ** 0.5)
        params[f"w{idx}"] = jax.random.uniform(
            kw, (fan_out, fan_in), jnp.float32, minval=-bound, maxval=bound)
        params[f"b{idx}"] = jax.random.uniform(
            kb, (fan_out,), jnp.float32, minval=-bound, maxval=bound)
    return params


def critic_reference_bf16(x, params):
    """Pure-JAX reference matching the kernel's bf16-input / f32-accum math."""
    def leaky(h):
        return jnp.maximum(h, 0.2 * h)
    bf = jnp.bfloat16
    h = jnp.dot(x.astype(bf), params["w1"].astype(bf).T,
                preferred_element_type=jnp.float32) + params["b1"]
    h = leaky(h)
    h = jnp.dot(h.astype(bf), params["w2"].astype(bf).T,
                preferred_element_type=jnp.float32) + params["b2"]
    h = leaky(h)
    h = jnp.dot(h.astype(bf), params["w3"].astype(bf).T,
                preferred_element_type=jnp.float32) + params["b3"]
    h = leaky(h)
    return h @ params["w4"].T + params["b4"]


def critic_reference_f32(x, params):
    """Pure f32 reference (PyTorch-equivalent math)."""
    def leaky(h):
        return jnp.where(h >= 0, h, 0.2 * h)
    h = leaky(x @ params["w1"].T + params["b1"])
    h = leaky(h @ params["w2"].T + params["b2"])
    h = leaky(h @ params["w3"].T + params["b3"])
    return h @ params["w4"].T + params["b4"]


if __name__ == "__main__":
    key = jax.random.PRNGKey(0)
    k_params, k_x, k_x2 = jax.random.split(key, 3)

    input_dim, hidden_dim = 16, 32
    params = init_critic_params(k_params, input_dim, hidden_dim)

    # Small batch not divisible by the tile -> single padded grid step.
    batch = 37
    x = jax.random.normal(k_x, (batch, input_dim), jnp.float32)
    out = jax.block_until_ready(critic_forward(x, params))

    # Larger batch with a small tile override -> multi-step (parallel) grid path.
    batch2 = 300
    x2 = jax.random.normal(k_x2, (batch2, input_dim), jnp.float32)
    out2 = jax.block_until_ready(critic_forward(x2, params, batch_tile=128))

    ref_bf16 = critic_reference_bf16(x, params)
    ref_f32 = critic_reference_f32(x, params)
    ref2_bf16 = critic_reference_bf16(x2, params)

    assert out.shape == (batch, 1), out.shape
    assert out2.shape == (batch2, 1), out2.shape
    assert jnp.allclose(out, ref_bf16, atol=2e-3, rtol=2e-3), "mismatch vs bf16 reference"
    assert jnp.allclose(out2, ref2_bf16, atol=2e-3, rtol=2e-3), "multi-tile mismatch vs bf16 reference"
    assert jnp.allclose(out, ref_f32, atol=5e-2, rtol=5e-2), "mismatch vs f32 reference"

    print("KERNEL_OK")
</pallas_src>

<mosaic_0001>
module attributes {stable_mosaic.version = 11 : i64} {
  func.func @critic_kernel(%arg0: i32, %arg1: memref<128x16xf32, #tpu.memory_space<vmem>>, %arg2: memref<32x16xbf16, #tpu.memory_space<vmem>>, %arg3: memref<32x1xf32, #tpu.memory_space<vmem>>, %arg4: memref<32x32xbf16, #tpu.memory_space<vmem>>, %arg5: memref<32x1xf32, #tpu.memory_space<vmem>>, %arg6: memref<32x32xbf16, #tpu.memory_space<vmem>>, %arg7: memref<32x1xf32, #tpu.memory_space<vmem>>, %arg8: memref<32x1xf32, #tpu.memory_space<vmem>>, %arg9: memref<1x1xf32, #tpu.memory_space<vmem>>, %arg10: memref<1x128xf32, #tpu.memory_space<vmem>>) attributes {dimension_semantics = [#tpu.dimension_semantics<parallel>], iteration_bounds = array<i64: 1>, scalar_prefetch = 0 : i64, scratch_operands = 0 : i64, tpu.core_type = #tpu.core_type<tc>, window_params = [{transform_indices = @transform_0, window_bounds = array<i64: 128, 16>}, {pipeline_mode = #tpu.pipeline_mode<synchronous>, transform_indices = @transform_1, window_bounds = array<i64: 32, 16>}, {pipeline_mode = #tpu.pipeline_mode<synchronous>, transform_indices = @transform_2, window_bounds = array<i64: 32, 1>}, {pipeline_mode = #tpu.pipeline_mode<synchronous>, transform_indices = @transform_3, window_bounds = array<i64: 32, 32>}, {pipeline_mode = #tpu.pipeline_mode<synchronous>, transform_indices = @transform_4, window_bounds = array<i64: 32, 1>}, {pipeline_mode = #tpu.pipeline_mode<synchronous>, transform_indices = @transform_5, window_bounds = array<i64: 32, 32>}, {pipeline_mode = #tpu.pipeline_mode<synchronous>, transform_indices = @transform_6, window_bounds = array<i64: 32, 1>}, {pipeline_mode = #tpu.pipeline_mode<synchronous>, transform_indices = @transform_7, window_bounds = array<i64: 32, 1>}, {pipeline_mode = #tpu.pipeline_mode<synchronous>, transform_indices = @transform_8, window_bounds = array<i64: 1, 1>}, {transform_indices = @transform_9, window_bounds = array<i64: 1, 128>}]} {
    %c0 = arith.constant 0 : index
    %c0_0 = arith.constant 0 : index
    %0 = vector.load %arg1[%c0, %c0_0] : memref<128x16xf32, #tpu.memory_space<vmem>>, vector<128x16xf32>
    %1 = arith.truncf %0 : vector<128x16xf32> to vector<128x16xbf16>
    %c0_1 = arith.constant 0 : index
    %c0_2 = arith.constant 0 : index
    %2 = vector.load %arg2[%c0_1, %c0_2] : memref<32x16xbf16, #tpu.memory_space<vmem>>, vector<32x16xbf16>
    "tpu.trace_start"() <{level = 10 : i32, message = "hk,nk->hn"}> : () -> ()
    %cst = arith.constant dense<0.000000e+00> : vector<32x128xf32>
    %3 = tpu.matmul %2, %1, %cst {dimension_numbers = #tpu.dot_dimension_numbers<[1], [1], [0], [0], [0, 0, 1, 0], [], []>} : vector<32x16xbf16>, vector<128x16xbf16>, vector<32x128xf32> -> vector<32x128xf32>
    "tpu.trace_stop"() : () -> ()
    %c0_3 = arith.constant 0 : index
    %c0_4 = arith.constant 0 : index
    %4 = vector.load %arg3[%c0_3, %c0_4] : memref<32x1xf32, #tpu.memory_space<vmem>>, vector<32x1xf32>
    %5 = vector.broadcast %4 : vector<32x1xf32> to vector<32x128xf32>
    %6 = arith.addf %3, %5 : vector<32x128xf32>
    %cst_5 = arith.constant 2.000000e-01 : f32
    %7 = vector.broadcast %cst_5 : f32 to vector<32x128xf32>
    %8 = arith.mulf %7, %6 : vector<32x128xf32>
    %9 = arith.maximumf %6, %8 : vector<32x128xf32>
    %c0_6 = arith.constant 0 : index
    %c0_7 = arith.constant 0 : index
    %10 = vector.load %arg4[%c0_6, %c0_7] : memref<32x32xbf16, #tpu.memory_space<vmem>>, vector<32x32xbf16>
    %11 = arith.truncf %9 : vector<32x128xf32> to vector<32x128xbf16>
    %cst_8 = arith.constant dense<0.000000e+00> : vector<32x128xf32>
    %12 = tpu.matmul %10, %11, %cst_8 {dimension_numbers = #tpu.dot_dimension_numbers<[1], [0], [0], [1], [0, 0, 1, 1], [], []>} : vector<32x32xbf16>, vector<32x128xbf16>, vector<32x128xf32> -> vector<32x128xf32>
    %c0_9 = arith.constant 0 : index
    %c0_10 = arith.constant 0 : index
    %13 = vector.load %arg5[%c0_9, %c0_10] : memref<32x1xf32, #tpu.memory_space<vmem>>, vector<32x1xf32>
    %14 = vector.broadcast %13 : vector<32x1xf32> to vector<32x128xf32>
    %15 = arith.addf %12, %14 : vector<32x128xf32>
    %cst_11 = arith.constant 2.000000e-01 : f32
    %16 = vector.broadcast %cst_11 : f32 to vector<32x128xf32>
    %17 = arith.mulf %16, %15 : vector<32x128xf32>
    %18 = arith.maximumf %15, %17 : vector<32x128xf32>
    %c0_12 = arith.constant 0 : index
    %c0_13 = arith.constant 0 : index
    %19 = vector.load %arg6[%c0_12, %c0_13] : memref<32x32xbf16, #tpu.memory_space<vmem>>, vector<32x32xbf16>
    %20 = arith.truncf %18 : vector<32x128xf32> to vector<32x128xbf16>
    %cst_14 = arith.constant dense<0.000000e+00> : vector<32x128xf32>
    %21 = tpu.matmul %19, %20, %cst_14 {dimension_numbers = #tpu.dot_dimension_numbers<[1], [0], [0], [1], [0, 0, 1, 1], [], []>} : vector<32x32xbf16>, vector<32x128xbf16>, vector<32x128xf32> -> vector<32x128xf32>
    %c0_15 = arith.constant 0 : index
    %c0_16 = arith.constant 0 : index
    %22 = vector.load %arg7[%c0_15, %c0_16] : memref<32x1xf32, #tpu.memory_space<vmem>>, vector<32x1xf32>
    %23 = vector.broadcast %22 : vector<32x1xf32> to vector<32x128xf32>
    %24 = arith.addf %21, %23 : vector<32x128xf32>
    %cst_17 = arith.constant 2.000000e-01 : f32
    %25 = vector.broadcast %cst_17 : f32 to vector<32x128xf32>
    %26 = arith.mulf %25, %24 : vector<32x128xf32>
    %27 = arith.maximumf %24, %26 : vector<32x128xf32>
    %c0_18 = arith.constant 0 : index
    %c0_19 = arith.constant 0 : index
    %28 = vector.load %arg8[%c0_18, %c0_19] : memref<32x1xf32, #tpu.memory_space<vmem>>, vector<32x1xf32>
    %29 = vector.broadcast %28 : vector<32x1xf32> to vector<32x128xf32>
    %30 = arith.mulf %27, %29 : vector<32x128xf32>
    %cst_20 = arith.constant dense<0.000000e+00> : vector<128xf32>
    %31 = vector.multi_reduction <add>, %30, %cst_20 [0] : vector<32x128xf32> to vector<128xf32>
    %32 = vector.shape_cast %31 : vector<128xf32> to vector<1x128xf32>
    %c0_21 = arith.constant 0 : index
    %c0_22 = arith.constant 0 : index
    %33 = vector.load %arg9[%c0_21, %c0_22] : memref<1x1xf32, #tpu.memory_space<vmem>>, vector<1x1xf32>
    %34 = vector.broadcast %33 : vector<1x1xf32> to vector<1x128xf32>
    %35 = arith.addf %32, %34 : vector<1x128xf32>
    %c0_23 = arith.constant 0 : index
    %c0_24 = arith.constant 0 : index
    %36 = vector.load %arg10[%c0_23, %c0_24] : memref<1x128xf32, #tpu.memory_space<vmem>>, vector<1x128xf32>
    tpu.vector_store %arg10[%c0_23, %c0_24], %35 {strides = array<i32>} : memref<1x128xf32, #tpu.memory_space<vmem>>, vector<1x128xf32>,
    return
  }
  func.func @transform_0(%arg0: i32) -> (i32, i32) {
    %c0_i32 = arith.constant 0 : i32
    %c0_i32_0 = arith.constant 0 : i32
    return %arg0, %c0_i32 : i32, i32
  }
  func.func @transform_1(%arg0: i32) -> (i32, i32) {
    %c0_i32 = arith.constant 0 : i32
    %c0_i32_0 = arith.constant 0 : i32
    %c0_i32_1 = arith.constant 0 : i32
    return %c0_i32, %c0_i32_0 : i32, i32
  }
  func.func @transform_2(%arg0: i32) -> (i32, i32) {
    %c0_i32 = arith.constant 0 : i32
    %c0_i32_0 = arith.constant 0 : i32
    %c0_i32_1 = arith.constant 0 : i32
    return %c0_i32, %c0_i32_0 : i32, i32
  }
  func.func @transform_3(%arg0: i32) -> (i32, i32) {
    %c0_i32 = arith.constant 0 : i32
    %c0_i32_0 = arith.constant 0 : i32
    %c0_i32_1 = arith.constant 0 : i32
    return %c0_i32, %c0_i32_0 : i32, i32
  }
  func.func @transform_4(%arg0: i32) -> (i32, i32) {
    %c0_i32 = arith.constant 0 : i32
    %c0_i32_0 = arith.constant 0 : i32
    %c0_i32_1 = arith.constant 0 : i32
    return %c0_i32, %c0_i32_0 : i32, i32
  }
  func.func @transform_5(%arg0: i32) -> (i32, i32) {
    %c0_i32 = arith.constant 0 : i32
    %c0_i32_0 = arith.constant 0 : i32
    %c0_i32_1 = arith.constant 0 : i32
    return %c0_i32, %c0_i32_0 : i32, i32
  }
  func.func @transform_6(%arg0: i32) -> (i32, i32) {
    %c0_i32 = arith.constant 0 : i32
    %c0_i32_0 = arith.constant 0 : i32
    %c0_i32_1 = arith.constant 0 : i32
    return %c0_i32, %c0_i32_0 : i32, i32
  }
  func.func @transform_7(%arg0: i32) -> (i32, i32) {
    %c0_i32 = arith.constant 0 : i32
    %c0_i32_0 = arith.constant 0 : i32
    %c0_i32_1 = arith.constant 0 : i32
    return %c0_i32, %c0_i32_0 : i32, i32
  }
  func.func @transform_8(%arg0: i32) -> (i32, i32) {
    %c0_i32 = arith.constant 0 : i32
    %c0_i32_0 = arith.constant 0 : i32
    %c0_i32_1 = arith.constant 0 : i32
    return %c0_i32, %c0_i32_0 : i32, i32
  }
  func.func @transform_9(%arg0: i32) -> (i32, i32) {
    %c0_i32 = arith.constant 0 : i32
    %c0_i32_0 = arith.constant 0 : i32
    return %c0_i32, %arg0 : i32, i32
  }
}

</mosaic_0001>

<llo_original>
// kernel: tpu_custom_call.1
$region0: #{tpu_custom_call.1}
  #allocation0 [shape = 'u32[]', space=smem, size = 0x4, offset = 0x4, fixed_abs, tag = 'smem constant byte address 0x4 - core index']
  #allocation1 [shape = 'u32[144,128]{1,0:T(1,128)}', space=vmem, size = 0x12000, scoped, tag = 'internal scratch']
  #allocation2 [shape = 'f32[1,1]{1,0:T(1,128)S(1)}', space=vmem, size = 0x200, scoped, tag = 'scoped memory for tpu_custom_call.1']
  %s0 = inlined_call_operand.vmem [shape: f32[128,16], index: 0, kind: input, shape index: {}]
  %s1 = inlined_call_operand.vmem [shape: bf16[32,16], index: 1, kind: input, shape index: {}]
  %s2 = inlined_call_operand.vmem [shape: f32[32,1], index: 2, kind: input, shape index: {}]
  %s3 = inlined_call_operand.vmem [shape: bf16[32,32], index: 3, kind: input, shape index: {}]
  %s4 = inlined_call_operand.vmem [shape: f32[32,1], index: 4, kind: input, shape index: {}]
  %s5 = inlined_call_operand.vmem [shape: bf16[32,32], index: 5, kind: input, shape index: {}]
  %s6 = inlined_call_operand.vmem [shape: f32[32,1], index: 6, kind: input, shape index: {}]
  %s7 = inlined_call_operand.vmem [shape: f32[32,1], index: 7, kind: input, shape index: {}]
  %s8 = inlined_call_operand.<no memory space> [shape: f32[1,1], index: 8, kind: input, shape index: {}]
  %s9 = inlined_call_operand.hbm [shape: f32[1,128], index: 9, kind: output, shape index: {}]
  %s10 = sld [smem:[#allocation0]]
  $region46: #{tpu_custom_call.1} parent=0
    _
  %s12 = ssub.s32 1, %s10
  %s13 = scalar_select 0, %s12, %s10
  %v14 = vstv %s8
  %15 = vst [vmem:[#allocation2] sm:$0x1] %v14
  $region1: #{tpu_custom_call.1} parent=0
    #allocation3 [shape = 'u8[512]{0}', space=vmem, size = 0x400, scoped, tag = 'output window, operand 0, single buffered']
    #allocation4 [shape = 's32[1]{0}', space=sflag, size = 0x4, scoped, tag = 'scoped memory for tpu_custom_call.1']
    %16 = vsyncpa [#allocation4], 0
    // Predicated region
    $region2: #{tpu_custom_call.1} parent=1 // pred_check
      _
    $region3: #{tpu_custom_call.1} parent=1 // pred_check_branch
      %18 = sbr.rel (0) target = $region5
    $region4: #{tpu_custom_call.1} parent=1 // pred_region
      _
    $region5: #{tpu_custom_call.1} parent=1 // pred_fallthru
      _
    // Predicated region
    $region6: #{tpu_custom_call.1} parent=1 // pred_check
      _
    $region7: #{tpu_custom_call.1} parent=1 // pred_check_branch
      %20 = sbr.rel (0) target = $region9
    $region8: #{tpu_custom_call.1} parent=1 // pred_region
      _
    $region9: #{tpu_custom_call.1} parent=1 // pred_fallthru
      _
    // Predicated region
    $region10: #{tpu_custom_call.1} parent=1 // pred_check
      _
    $region11: #{tpu_custom_call.1} parent=1 // pred_check_branch
      %22 = sbr.rel (0) target = $region13
    $region12: #{tpu_custom_call.1} parent=1 // pred_region
      _
    $region13: #{tpu_custom_call.1} parent=1 // pred_fallthru
      _
    // Predicated region
    $region14: #{tpu_custom_call.1} parent=1 // pred_check
      _
    $region15: #{tpu_custom_call.1} parent=1 // pred_check_branch
      %24 = sbr.rel (0) target = $region17
    $region16: #{tpu_custom_call.1} parent=1 // pred_region
      _
    $region17: #{tpu_custom_call.1} parent=1 // pred_fallthru
      _
    // Predicated region
    $region18: #{tpu_custom_call.1} parent=1 // pred_check
      _
    $region19: #{tpu_custom_call.1} parent=1 // pred_check_branch
      %26 = sbr.rel (0) target = $region21
    $region20: #{tpu_custom_call.1} parent=1 // pred_region
      _
    $region21: #{tpu_custom_call.1} parent=1 // pred_fallthru
      _
    // Predicated region
    $region22: #{tpu_custom_call.1} parent=1 // pred_check
      _
    $region23: #{tpu_custom_call.1} parent=1 // pred_check_branch
      %28 = sbr.rel (0) target = $region25
    $region24: #{tpu_custom_call.1} parent=1 // pred_region
      _
    $region25: #{tpu_custom_call.1} parent=1 // pred_fallthru
      _
    // Predicated region
    $region26: #{tpu_custom_call.1} parent=1 // pred_check
      _
    $region27: #{tpu_custom_call.1} parent=1 // pred_check_branch
      %30 = sbr.rel (0) target = $region29
    $region28: #{tpu_custom_call.1} parent=1 // pred_region
      _
    $region29: #{tpu_custom_call.1} parent=1 // pred_fallthru
      _
    // Predicated region
    $region30: #{tpu_custom_call.1} parent=1 // pred_check
      _
    $region31: #{tpu_custom_call.1} parent=1 // pred_check_branch
      %32 = sbr.rel (0) target = $region33
    $region32: #{tpu_custom_call.1} parent=1 // pred_region
      _
    $region33: #{tpu_custom_call.1} parent=1 // pred_fallthru
      _
    // Predicated region
    $region34: #{tpu_custom_call.1} parent=1 // pred_check
      _
    $region35: #{tpu_custom_call.1} parent=1 // pred_check_branch
      %34 = sbr.rel (0) target = $region37
    $region36: #{tpu_custom_call.1} parent=1 // pred_region
      _
    $region37: #{tpu_custom_call.1} parent=1 // pred_fallthru
      _
    %v36 = vld [vmem:[%s0] sm:$0xff]
    %v37 = vld [vmem:[%s0 + $0x8] sm:$0xff]
    %v38 = vld [vmem:[%s0 + $0x10] sm:$0xff]
    %v39 = vld [vmem:[%s0 + $0x18] sm:$0xff]
    %v40 = vld [vmem:[%s0 + $0x20] sm:$0xff]
    %v41 = vld [vmem:[%s0 + $0x28] sm:$0xff]
    %v42 = vld [vmem:[%s0 + $0x30] sm:$0xff]
    %v43 = vld [vmem:[%s0 + $0x38] sm:$0xff]
    %v44 = vld [vmem:[%s0 + $0x40] sm:$0xff]
    %v45 = vld [vmem:[%s0 + $0x48] sm:$0xff]
    %v46 = vld [vmem:[%s0 + $0x50] sm:$0xff]
    %v47 = vld [vmem:[%s0 + $0x58] sm:$0xff]
    %v48 = vld [vmem:[%s0 + $0x60] sm:$0xff]
    %v49 = vld [vmem:[%s0 + $0x68] sm:$0xff]
    %v50 = vld [vmem:[%s0 + $0x70] sm:$0xff]
    %v51 = vld [vmem:[%s0 + $0x78] sm:$0xff]
    %v52 = vpack.c.bf16 %v37, %v36
    %v53 = vpack.c.bf16 %v39, %v38
    %v54 = vpack.c.bf16 %v41, %v40
    %v55 = vpack.c.bf16 %v43, %v42
    %v56 = vpack.c.bf16 %v45, %v44
    %v57 = vpack.c.bf16 %v47, %v46
    %v58 = vpack.c.bf16 %v49, %v48
    %v59 = vpack.c.bf16 %v51, %v50
    %v60 = vld [vmem:[%s1] sm:$0xf]
    %v61 = vld [vmem:[%s1 + $0x4] sm:$0xf]
    %v62 = vld [vmem:[%s1 + $0x8] sm:$0xf]
    %v63 = vld [vmem:[%s1 + $0xc] sm:$0xf]
    %v64 = vld [vmem:[%s2] sm:$0xff]
    %v65 = vld [vmem:[%s2 + $0x8] sm:$0xff]
    %v66 = vld [vmem:[%s2 + $0x10] sm:$0xff]
    %v67 = vld [vmem:[%s2 + $0x18] sm:$0xff]
    %69 = vset.pattern.permute.xlu0 0
    %70 = vperm.xlu0 %69, %v64
    %v71 = vpop.permute.xlu0 %70
    %74 = vset.pattern.permute.xlu0 0
    %75 = vperm.xlu0 %74, %v65
    %v76 = vpop.permute.xlu0 %75
    %79 = vset.pattern.permute.xlu0 0
    %80 = vperm.xlu0 %79, %v66
    %v81 = vpop.permute.xlu0 %80
    %84 = vset.pattern.permute.xlu0 0
    %85 = vperm.xlu0 %84, %v67
    %v86 = vpop.permute.xlu0 %85
    %v92 = vunpack.c.l.b16 %v60
    %v93 = vunpack.c.l.b16 %v61
    %v94 = vunpack.c.l.b16 %v62
    %v95 = vunpack.c.l.b16 %v63
    %v96 = vpack.c.b16 %v93, %v92
    %v97 = vpack.c.b16 %v95, %v94
    %vm98 = vcmask 130048
    %v100 = vsel %vm98, %v96, 0
    %v103 = vsel %vm98, %v97, 0
    %v106 = vsel %vm98, %v52, 0
    %v109 = vsel %vm98, %v53, 0
    %v112 = vsel %vm98, %v54, 0
    %v115 = vsel %vm98, %v55, 0
    %v118 = vsel %vm98, %v56, 0
    %v121 = vsel %vm98, %v57, 0
    %v124 = vsel %vm98, %v58, 0
    %v127 = vsel %vm98, %v59, 0
    %129 = vmatprep.subr.bf16.mxu0 0
    %130 = vmatpush1.bf16.xpose.msra.mxu0 %v106
    %131 = vmatprep.subr.bf16.mxu0 0
    %132 = vmatpush1.bf16.xpose.msra.mxu0 %v109
    %133 = vmatprep.subr.bf16.mxu0 0
    %134 = vmatpush1.bf16.xpose.msra.mxu0 %v112
    %135 = vmatprep.subr.bf16.mxu0 0
    %136 = vmatpush1.bf16.xpose.msra.mxu0 %v115
    %137 = vmatprep.subr.bf16.mxu0 0
    %138 = vmatpush1.bf16.xpose.msra.mxu0 %v118
    %139 = vmatprep.subr.bf16.mxu0 0
    %140 = vmatpush1.bf16.xpose.msra.mxu0 %v121
    %141 = vmatprep.subr.bf16.mxu0 0
    %142 = vmatpush1.bf16.xpose.msra.mxu0 %v124
    %143 = vmatprep.subr.bf16.mxu0 0
    %144 = vmatpush1.bf16.xpose.msra.mxu0 %v127
    %145 = vmatprep.subr.bf16.mxu0 0
    %146 = vmatpush1.bf16.xpose.msra.mxu0 0
    %147 = vmatprep.subr.bf16.mxu0 0
    %148 = vmatpush1.bf16.xpose.msra.mxu0 0
    %149 = vmatprep.subr.bf16.mxu0 0
    %150 = vmatpush1.bf16.xpose.msra.mxu0 0
    %151 = vmatprep.subr.bf16.mxu0 0
    %152 = vmatpush1.bf16.xpose.msra.mxu0 0
    %153 = vmatprep.subr.bf16.mxu0 0
    %154 = vmatpush1.bf16.xpose.msra.mxu0 0
    %155 = vmatprep.subr.bf16.mxu0 0
    %156 = vmatpush1.bf16.xpose.msra.mxu0 0
    %157 = vmatprep.subr.bf16.mxu0 0
    %158 = vmatpush1.bf16.xpose.msra.mxu0 0
    %159 = vmatprep.subr.bf16.mxu0 0
    %160 = vmatpush1.bf16.xpose.msra.mxu0 0
    %161 = vmatprep.mubr.bf16.mxu0 0
    %162 = vmatmul.mubr.bf16.gmra.mrb[0].mxu0 %v100
    %v163 = vpop.f32.mrb[0].mxu0
    %v164 = vadd.f32 %v71, %v163
    %v165 = vpop.f32.mrb[0].mxu0
    %v166 = vpop.f32.mrb[0].mxu0
    %v167 = vadd.f32 %v76, %v166
    %v168 = vpop.f32.mrb[0].mxu0
    %169 = vmatprep.mubr.bf16.mxu0 0
    %170 = vmatmul.mubr.bf16.gmra.mrb[0].mxu0 %v103
    %v171 = vpop.f32.mrb[0].mxu0
    %v172 = vadd.f32 %v81, %v171
    %v173 = vpop.f32.mrb[0].mxu0
    %v174 = vpop.f32.mrb[0].mxu0
    %v175 = vadd.f32 %v86, %v174
    %v176 = vpop.f32.mrb[0].mxu0
    %177 = vdwg.mxu0
    %v178 = vmul.f32 %v164, 0.2
    %v179 = vmul.f32 %v167, 0.2
    %v180 = vmul.f32 %v172, 0.2
    %v181 = vmul.f32 %v175, 0.2
    %v182 = vmax.f32 %v164, %v178
    %v183 = vmax.f32 %v167, %v179
    %v184 = vmax.f32 %v172, %v180
    %v185 = vmax.f32 %v175, %v181
    %v186 = vld [vmem:[%s3] sm:$0xf]
    %v187 = vld [vmem:[%s3 + $0x4] sm:$0xf]
    %v188 = vld [vmem:[%s3 + $0x8] sm:$0xf]
    %v189 = vld [vmem:[%s3 + $0xc] sm:$0xf]
    %v190 = vpack.c.bf16 %v183, %v182
    %v191 = vpack.c.bf16 %v185, %v184
    %v192 = vld [vmem:[%s4] sm:$0xff]
    %v193 = vld [vmem:[%s4 + $0x8] sm:$0xff]
    %v194 = vld [vmem:[%s4 + $0x10] sm:$0xff]
    %v195 = vld [vmem:[%s4 + $0x18] sm:$0xff]
    %197 = vset.pattern.permute.xlu0 0
    %198 = vperm.xlu0 %197, %v192
    %v199 = vpop.permute.xlu0 %198
    %202 = vset.pattern.permute.xlu0 0
    %203 = vperm.xlu0 %202, %v193
    %v204 = vpop.permute.xlu0 %203
    %207 = vset.pattern.permute.xlu0 0
    %208 = vperm.xlu0 %207, %v194
    %v209 = vpop.permute.xlu0 %208
    %212 = vset.pattern.permute.xlu0 0
    %213 = vperm.xlu0 %212, %v195
    %v214 = vpop.permute.xlu0 %213
    %v220 = vunpack.c.l.b16 %v186
    %v221 = vunpack.c.l.b16 %v187
    %v222 = vunpack.c.l.b16 %v188
    %v223 = vunpack.c.l.b16 %v189
    %v224 = vpack.c.b16 %v221, %v220
    %v225 = vpack.c.b16 %v223, %v222
    %vm226 = vcmask 261120
    %v228 = vsel %vm226, %v224, 0
    %v231 = vsel %vm226, %v225, 0
    %233 = vmatprep.subr.bf16.mxu0 0
    %234 = vmatpush1.bf16.msra.mxu0 %v190
    %235 = vmatprep.subr.bf16.mxu0 0
    %236 = vmatpush1.bf16.msra.mxu0 %v191
    %237 = vmatprep.subr.bf16.mxu0 0
    %238 = vmatpush1.bf16.msra.mxu0 0
    %239 = vmatprep.subr.bf16.mxu0 0
    %240 = vmatpush1.bf16.msra.mxu0 0
    %241 = vmatprep.subr.bf16.mxu0 0
    %242 = vmatpush1.bf16.msra.mxu0 0
    %243 = vmatprep.subr.bf16.mxu0 0
    %244 = vmatpush1.bf16.msra.mxu0 0
    %245 = vmatprep.subr.bf16.mxu0 0
    %246 = vmatpush1.bf16.msra.mxu0 0
    %247 = vmatprep.subr.bf16.mxu0 0
    %248 = vmatpush1.bf16.msra.mxu0 0
    %249 = vmatprep.subr.bf16.mxu0 0
    %250 = vmatpush1.bf16.msra.mxu0 0
    %251 = vmatprep.subr.bf16.mxu0 0
    %252 = vmatpush1.bf16.msra.mxu0 0
    %253 = vmatprep.subr.bf16.mxu0 0
    %254 = vmatpush1.bf16.msra.mxu0 0
    %255 = vmatprep.subr.bf16.mxu0 0
    %256 = vmatpush1.bf16.msra.mxu0 0
    %257 = vmatprep.subr.bf16.mxu0 0
    %258 = vmatpush1.bf16.msra.mxu0 0
    %259 = vmatprep.subr.bf16.mxu0 0
    %260 = vmatpush1.bf16.msra.mxu0 0
    %261 = vmatprep.subr.bf16.mxu0 0
    %262 = vmatpush1.bf16.msra.mxu0 0
    %263 = vmatprep.subr.bf16.mxu0 0
    %264 = vmatpush1.bf16.msra.mxu0 0
    %265 = vmatprep.mubr.bf16.mxu0 0
    %266 = vmatmul.mubr.bf16.gmra.mrb[0].mxu0 %v228
    %v267 = vpop.f32.mrb[0].mxu0
    %v268 = vadd.f32 %v199, %v267
    %v269 = vpop.f32.mrb[0].mxu0
    %v270 = vpop.f32.mrb[0].mxu0
    %v271 = vadd.f32 %v204, %v270
    %v272 = vpop.f32.mrb[0].mxu0
    %273 = vmatprep.mubr.bf16.mxu0 0
    %274 = vmatmul.mubr.bf16.gmra.mrb[0].mxu0 %v231
    %v275 = vpop.f32.mrb[0].mxu0
    %v276 = vadd.f32 %v209, %v275
    %v277 = vpop.f32.mrb[0].mxu0
    %v278 = vpop.f32.mrb[0].mxu0
    %v279 = vadd.f32 %v214, %v278
    %v280 = vpop.f32.mrb[0].mxu0
    %281 = vdwg.mxu0
    %v282 = vmul.f32 %v268, 0.2
    %v283 = vmul.f32 %v271, 0.2
    %v284 = vmul.f32 %v276, 0.2
    %v285 = vmul.f32 %v279, 0.2
    %v286 = vmax.f32 %v268, %v282
    %v287 = vmax.f32 %v271, %v283
    %v288 = vmax.f32 %v276, %v284
    %v289 = vmax.f32 %v279, %v285
    %v290 = vld [vmem:[%s5] sm:$0xf]
    %v291 = vld [vmem:[%s5 + $0x4] sm:$0xf]
    %v292 = vld [vmem:[%s5 + $0x8] sm:$0xf]
    %v293 = vld [vmem:[%s5 + $0xc] sm:$0xf]
    %v294 = vpack.c.bf16 %v287, %v286
    %v295 = vpack.c.bf16 %v289, %v288
    %v296 = vld [vmem:[%s6] sm:$0xff]
    %v297 = vld [vmem:[%s6 + $0x8] sm:$0xff]
    %v298 = vld [vmem:[%s6 + $0x10] sm:$0xff]
    %v299 = vld [vmem:[%s6 + $0x18] sm:$0xff]
    %301 = vset.pattern.permute.xlu0 0
    %302 = vperm.xlu0 %301, %v296
    %v303 = vpop.permute.xlu0 %302
    %306 = vset.pattern.permute.xlu0 0
    %307 = vperm.xlu0 %306, %v297
    %v308 = vpop.permute.xlu0 %307
    %311 = vset.pattern.permute.xlu0 0
    %312 = vperm.xlu0 %311, %v298
    %v313 = vpop.permute.xlu0 %312
    %316 = vset.pattern.permute.xlu0 0
    %317 = vperm.xlu0 %316, %v299
    %v318 = vpop.permute.xlu0 %317
    %v324 = vunpack.c.l.b16 %v290
    %v325 = vunpack.c.l.b16 %v291
    %v326 = vunpack.c.l.b16 %v292
    %v327 = vunpack.c.l.b16 %v293
    %v328 = vpack.c.b16 %v325, %v324
    %v329 = vpack.c.b16 %v327, %v326
    %v331 = vsel %vm226, %v328, 0
    %v334 = vsel %vm226, %v329, 0
    %336 = vmatprep.subr.bf16.mxu0 0
    %337 = vmatpush1.bf16.msra.mxu0 %v294
    %338 = vmatprep.subr.bf16.mxu0 0
    %339 = vmatpush1.bf16.msra.mxu0 %v295
    %340 = vmatprep.subr.bf16.mxu0 0
    %341 = vmatpush1.bf16.msra.mxu0 0
    %342 = vmatprep.subr.bf16.mxu0 0
    %343 = vmatpush1.bf16.msra.mxu0 0
    %344 = vmatprep.subr.bf16.mxu0 0
    %345 = vmatpush1.bf16.msra.mxu0 0
    %346 = vmatprep.subr.bf16.mxu0 0
    %347 = vmatpush1.bf16.msra.mxu0 0
    %348 = vmatprep.subr.bf16.mxu0 0
    %349 = vmatpush1.bf16.msra.mxu0 0
    %350 = vmatprep.subr.bf16.mxu0 0
    %351 = vmatpush1.bf16.msra.mxu0 0
    %352 = vmatprep.subr.bf16.mxu0 0
    %353 = vmatpush1.bf16.msra.mxu0 0
    %354 = vmatprep.subr.bf16.mxu0 0
    %355 = vmatpush1.bf16.msra.mxu0 0
    %356 = vmatprep.subr.bf16.mxu0 0
    %357 = vmatpush1.bf16.msra.mxu0 0
    %358 = vmatprep.subr.bf16.mxu0 0
    %359 = vmatpush1.bf16.msra.mxu0 0
    %360 = vmatprep.subr.bf16.mxu0 0
    %361 = vmatpush1.bf16.msra.mxu0 0
    %362 = vmatprep.subr.bf16.mxu0 0
    %363 = vmatpush1.bf16.msra.mxu0 0
    %364 = vmatprep.subr.bf16.mxu0 0
    %365 = vmatpush1.bf16.msra.mxu0 0
    %366 = vmatprep.subr.bf16.mxu0 0
    %367 = vmatpush1.bf16.msra.mxu0 0
    %368 = vmatprep.mubr.bf16.mxu0 0
    %369 = vmatmul.mubr.bf16.gmra.mrb[0].mxu0 %v331
    %v370 = vpop.f32.mrb[0].mxu0
    %v371 = vadd.f32 %v303, %v370
    %v372 = vpop.f32.mrb[0].mxu0
    %v373 = vpop.f32.mrb[0].mxu0
    %v374 = vadd.f32 %v308, %v373
    %v375 = vpop.f32.mrb[0].mxu0
    %376 = vmatprep.mubr.bf16.mxu0 0
    %377 = vmatmul.mubr.bf16.gmra.mrb[0].mxu0 %v334
    %v378 = vpop.f32.mrb[0].mxu0
    %v379 = vadd.f32 %v313, %v378
    %v380 = vpop.f32.mrb[0].mxu0
    %v381 = vpop.f32.mrb[0].mxu0
    %v382 = vadd.f32 %v318, %v381
    %v383 = vpop.f32.mrb[0].mxu0
    %384 = vdwg.mxu0
    %v385 = vmul.f32 %v371, 0.2
    %v386 = vmul.f32 %v374, 0.2
    %v387 = vmul.f32 %v379, 0.2
    %v388 = vmul.f32 %v382, 0.2
    %v389 = vmax.f32 %v371, %v385
    %v390 = vmax.f32 %v374, %v386
    %v391 = vmax.f32 %v379, %v387
    %v392 = vmax.f32 %v382, %v388
    %v393 = vld [vmem:[%s7] sm:$0xff]
    %v394 = vld [vmem:[%s7 + $0x8] sm:$0xff]
    %v395 = vld [vmem:[%s7 + $0x10] sm:$0xff]
    %v396 = vld [vmem:[%s7 + $0x18] sm:$0xff]
    %398 = vset.pattern.permute.xlu0 0
    %399 = vperm.xlu0 %398, %v393
    %v400 = vpop.permute.xlu0 %399
    %403 = vset.pattern.permute.xlu0 0
    %404 = vperm.xlu0 %403, %v394
    %v405 = vpop.permute.xlu0 %404
    %408 = vset.pattern.permute.xlu0 0
    %409 = vperm.xlu0 %408, %v395
    %v410 = vpop.permute.xlu0 %409
    %413 = vset.pattern.permute.xlu0 0
    %414 = vperm.xlu0 %413, %v396
    %v415 = vpop.permute.xlu0 %414
    %v417 = vmul.f32 %v389, %v400
    %v418 = vmul.f32 %v390, %v405
    %v419 = vmul.f32 %v391, %v410
    %v420 = vmul.f32 %v392, %v415
    %v421 = vadd.f32 %v417, %v418
    %v422 = vadd.f32 %v421, %v419
    %v423 = vadd.f32 %v422, %v420
    %v424 = vrot.slane %v423, 4
    %v425 = vadd.f32 %v423, %v424
    %v426 = vrot.slane %v425, 2
    %v427 = vadd.f32 %v425, %v426
    %v428 = vrot.slane %v427, 1
    %v429 = vadd.f32 %v427, %v428
    %v430 = vld [vmem:[#allocation2] sm:$0x1]
    %432 = vset.pattern.permute.xlu0 0
    %433 = vperm.xlu0 %432, %v430
    %v434 = vpop.permute.xlu0 %433
    %v436 = vlaneseq
    %v437 = vshrl.u32 %v436, 7
    %v438 = vsub.s32 0, %v437
    %v439 = vrot.slane %v434, %v438
    %v440 = vadd.f32 %v429, %v439
    %441 = vst [vmem:[#allocation3] sm:$0x1] %v440
    // Predicated region
    $region38: #{tpu_custom_call.1} parent=1 // pred_check
      _
    $region39: #{tpu_custom_call.1} parent=1 // pred_check_branch
      %443 = sbr.rel (0) target = $region41
    $region40: #{tpu_custom_call.1} parent=1 // pred_region
      %s445 = ssub.s32 16, 16
      %446 = vsyncadd [#allocation4], %s445
      %s448 = sshll.u32 [#allocation3], 4
      %s449 = int_to_ptr.vmem [resolvable:$true] %s448
      %451 = dma.vmem_to_hbm [thread:$0]  %s449, 16, %s9, [#allocation4]
    $region41: #{tpu_custom_call.1} parent=1 // pred_fallthru
      _
    // Predicated region
    $region42: #{tpu_custom_call.1} parent=1 // pred_check
      _
    $region43: #{tpu_custom_call.1} parent=1 // pred_check_branch
      %453 = sbr.rel (0) target = $region45
    $region44: #{tpu_custom_call.1} parent=1 // pred_region
      %454 = dma.done [#allocation4], 16
    $region45: #{tpu_custom_call.1} parent=1 // pred_fallthru
      _
    %455 = vsyncpa [#allocation4], 1

</llo_original>
